<compile_context>
chip_gen: v6e
topology: v6e:2x2x1
jax: 0.10.0
libtpu: 0.0.40
codegen_flags: <defaults>
</compile_context>

<pallas_src>
import numpy as np
import jax
import jax.numpy as jnp
from jax.experimental import pallas as pl
from jax.experimental.pallas import tpu as pltpu


def _class_balanced_weights(beta, sample_per_class, num_class):
    """Deterministic parameter setup (matches ClassBalancedLoss.__get_weights)."""
    spc = np.asarray(sample_per_class, dtype=np.float64)
    effective_number = 1.0 - np.power(beta, spc)
    weights = (1.0 - beta) / effective_number
    weights = weights / np.sum(weights) * num_class
    return tuple(float(w) for w in weights)


def _vmem_capacity_bytes():
    try:
        return int(pltpu.get_tpu_info().vmem_capacity_bytes)
    except Exception:
        return 64 << 20  # conservative fallback (v7x per-TC VMEM)


def _min_sublane(itemsize):
    """Rows per native packed tile for a given element size (f32:8, bf16:16, i8:32)."""
    return max(8, 32 // max(1, itemsize))


def _pick_row_tile(hw128, bytes_per_row, vmem_cap, *, min_rows=8, max_rows=2048,
                   n_buffers=2):
    """Rows (of 128 lanes) per grid step. Sized so the n_buffers-deep pipelined
    input tiles stay within ~1/4 of the VMEM budget; rounded to the packing
    granularity. If hw128 fits in one tile, use the full extent (no tail mask)."""
    budget = vmem_cap // 4
    r = budget // max(1, bytes_per_row * n_buffers)
    r = int(min(r, max_rows))
    r = max(min_rows, (r // min_rows) * min_rows)
    if hw128 <= r:
        return hw128
    return r


def class_balanced_focal_loss(prob, label, *, gamma=2.0, beta=0.999,
                              sample_per_class=(20, 75, 5),
                              reduction="mean"):
    """prob: (B, C, H, W) float (already softmax-ed, f32 or bf16);
    label: (B, H, W) integer (any int dtype, kept native)."""
    B, C, H, W = prob.shape
    assert len(sample_per_class) == C, "sample_per_class must have num_class entries"
    weights = _class_balanced_weights(beta, sample_per_class, C)

    HW = H * W
    N = B * HW
    assert HW % 128 == 0, "H*W must be a multiple of 128"  # TODO(synk): pad ragged spatial dims
    hw128 = HW // 128

    label = jnp.asarray(label)
    assert jnp.issubdtype(label.dtype, jnp.integer), "label must be an integer array"

    vmem_cap = _vmem_capacity_bytes()
    prob_isz = jnp.dtype(prob.dtype).itemsize
    lab_isz = jnp.dtype(label.dtype).itemsize
    min_rows = max(_min_sublane(prob_isz), _min_sublane(lab_isz))
    bytes_per_row = C * 128 * prob_isz + 128 * lab_isz
    R = _pick_row_tile(hw128, bytes_per_row, vmem_cap, min_rows=min_rows)
    n_tiles = pl.cdiv(hw128, R)
    needs_tail_mask = (hw128 % R) != 0

    # Contiguous views only -- no HBM transpose / dtype widening before the kernel.
    prob_v = prob.reshape(B, C, hw128, 128)
    label_v = label.reshape(B, hw128, 128)

    gamma_f = float(gamma)
    gamma_int = int(gamma_f) if (gamma_f.is_integer() and gamma_f >= 0) else None

    def kernel(p_ref, l_ref, out_ref):
        # p_ref: (C, R, 128) prob tile; l_ref: (R, 128) labels (native dtype);
        # out_ref: (1, 128) per-(batch, tile) lane partial sums.
        lab = l_ref[...]
        p_sel = jnp.ones(lab.shape, jnp.float32)   # -log(1)=0 if label out of range
        w_sel = jnp.zeros(lab.shape, jnp.float32)
        for c in range(C):                          # C small & static -> unrolled
            m = lab == c
            p_sel = jnp.where(m, p_ref[c].astype(jnp.float32), p_sel)
            w_sel = jnp.where(m, jnp.float32(weights[c]), w_sel)

        if needs_tail_mask:                         # static: only on ragged last tile
            row = jax.lax.broadcasted_iota(jnp.int32, lab.shape, 0)
            valid = (pl.program_id(1) * R + row) < hw128
            p_sel = jnp.where(valid, p_sel, jnp.float32(1.0))
            w_sel = jnp.where(valid, w_sel, jnp.float32(0.0))

        one_minus = 1.0 - p_sel
        if gamma_int is not None:                   # VPU multiplies, no pow/EUP
            focal = jnp.ones_like(one_minus)
            if gamma_int >= 1:
                focal = one_minus
                for _ in range(gamma_int - 1):
                    focal = focal * one_minus
        else:
            focal = jnp.power(jnp.maximum(one_minus, 0.0), jnp.float32(gamma_f))

        ce = -jnp.log(p_sel)                        # one EUP log per pixel
        loss = focal * (w_sel * ce)                 # (R, 128)
        out_ref[...] = jnp.sum(loss, axis=0, keepdims=True)

    # Explicit scoped-VMEM budget: 2x double-buffered inputs + generous headroom.
    in_bytes = 2 * (C * R * 128 * prob_isz + R * 128 * lab_isz)
    vmem_limit = int(min(vmem_cap, max(in_bytes + (8 << 20), 32 << 20)))

    partials = pl.pallas_call(
        kernel,
        out_shape=jax.ShapeDtypeStruct((B, n_tiles, 1, 128), jnp.float32),
        grid=(B, n_tiles),
        in_specs=[
            pl.BlockSpec((None, C, R, 128), lambda b, i: (b, 0, i, 0)),  # prob tile
            pl.BlockSpec((None, R, 128), lambda b, i: (b, i, 0)),        # label tile
        ],
        out_specs=pl.BlockSpec((None, None, 1, 128), lambda b, i: (b, i, 0, 0)),
        compiler_params=pltpu.CompilerParams(
            dimension_semantics=("parallel", "parallel"),
            vmem_limit_bytes=vmem_limit),
    )(prob_v, label_v)

    total = jnp.sum(partials, dtype=jnp.float32)
    if reduction == "mean":
        return total / jnp.float32(N)
    if reduction == "sum":
        return total
    # TODO(synk): reduction='none' (per-pixel loss map) not produced by this reduced kernel.
    raise ValueError(f"unsupported reduction: {reduction}")


def _reference_loss(prob, label, *, gamma, beta, sample_per_class, reduction="mean"):
    """Plain-JAX reference mirroring the PyTorch forward (gather form of one-hot)."""
    B, C, H, W = prob.shape
    w = jnp.asarray(_class_balanced_weights(beta, sample_per_class, C), dtype=jnp.float32)
    lab = label.astype(jnp.int32)
    p_f32 = prob.astype(jnp.float32)
    p_lab = jnp.take_along_axis(p_f32, lab[:, None], axis=1)[:, 0]   # (B,H,W)
    w_lab = w[lab]                                                   # (B,H,W)
    loss = ((1.0 - p_lab) ** gamma) * w_lab * (-jnp.log(p_lab))
    return jnp.mean(loss) if reduction == "mean" else jnp.sum(loss)


if __name__ == "__main__":
    key = jax.random.PRNGKey(0)
    B, C, H, W = 2, 3, 16, 16   # num_class=3 matches sample_per_class=(20, 75, 5)
    k_logit, k_label = jax.random.split(key)

    logits = jax.random.normal(k_logit, (B, C, H, W), dtype=jnp.float32)
    label = jax.random.randint(k_label, (B, H, W), 0, C, dtype=jnp.int32)

    # (a) bf16 probabilities: half the HBM traffic for the dominant input.
    prob_bf16 = jax.nn.softmax(logits, axis=1).astype(jnp.bfloat16)
    out_bf16 = class_balanced_focal_loss(prob_bf16, label, gamma=2.0, beta=0.999,
                                         sample_per_class=(20, 75, 5), reduction="mean")
    out_bf16 = jax.block_until_ready(out_bf16)
    ref_bf16 = _reference_loss(prob_bf16, label, gamma=2.0, beta=0.999,
                               sample_per_class=(20, 75, 5))
    assert jnp.allclose(out_bf16, ref_bf16, rtol=1e-4, atol=1e-6), (out_bf16, ref_bf16)

    # (b) f32 probabilities: exact module dtype.
    prob_f32 = jax.nn.softmax(logits, axis=1)
    out_f32 = class_balanced_focal_loss(prob_f32, label, gamma=2.0, beta=0.999,
                                        sample_per_class=(20, 75, 5), reduction="mean")
    out_f32 = jax.block_until_ready(out_f32)
    ref_f32 = _reference_loss(prob_f32, label, gamma=2.0, beta=0.999,
                              sample_per_class=(20, 75, 5))
    assert jnp.allclose(out_f32, ref_f32, rtol=1e-5, atol=1e-6), (out_f32, ref_f32)

    print("KERNEL_OK")
</pallas_src>

<mosaic_0001>
module attributes {stable_mosaic.version = 11 : i64} {
  func.func @kernel(%arg0: i32, %arg1: i32, %arg2: memref<1x3x2x128xbf16, #tpu.memory_space<vmem>>, %arg3: memref<1x2x128xi32, #tpu.memory_space<vmem>>, %arg4: memref<1x1x1x128xf32, #tpu.memory_space<vmem>>) attributes {dimension_semantics = [#tpu.dimension_semantics<parallel>, #tpu.dimension_semantics<parallel>], iteration_bounds = array<i64: 2, 1>, scalar_prefetch = 0 : i64, scratch_operands = 0 : i64, tpu.core_type = #tpu.core_type<tc>, window_params = [{transform_indices = @transform_0, window_bounds = array<i64: 1, 3, 2, 128>}, {transform_indices = @transform_1, window_bounds = array<i64: 1, 2, 128>}, {transform_indices = @transform_2, window_bounds = array<i64: 1, 1, 1, 128>}]} {
    %c0 = arith.constant 0 : index
    %c0_0 = arith.constant 0 : index
    %c0_1 = arith.constant 0 : index
    %0 = vector.load %arg3[%c0, %c0_0, %c0_1] : memref<1x2x128xi32, #tpu.memory_space<vmem>>, vector<1x2x128xi32>
    %1 = vector.shape_cast %0 : vector<1x2x128xi32> to vector<2x128xi32>
    %cst = arith.constant 1.000000e+00 : f32
    %2 = vector.broadcast %cst : f32 to vector<2x128xf32>
    %cst_2 = arith.constant 0.000000e+00 : f32
    %3 = vector.broadcast %cst_2 : f32 to vector<2x128xf32>
    %c0_i32 = arith.constant 0 : i32
    %4 = vector.broadcast %c0_i32 : i32 to vector<2x128xi32>
    %5 = arith.cmpi eq, %1, %4 : vector<2x128xi32>
    %c0_3 = arith.constant 0 : index
    %c0_4 = arith.constant 0 : index
    %c0_5 = arith.constant 0 : index
    %c0_6 = arith.constant 0 : index
    %6 = vector.load %arg2[%c0_3, %c0_4, %c0_5, %c0_6] : memref<1x3x2x128xbf16, #tpu.memory_space<vmem>>, vector<1x1x2x128xbf16>
    %7 = vector.shape_cast %6 : vector<1x1x2x128xbf16> to vector<2x128xbf16>
    %8 = arith.extf %7 : vector<2x128xbf16> to vector<2x128xf32>
    %9 = arith.select %5, %8, %2 : vector<2x128xi1>, vector<2x128xf32>
    %cst_7 = arith.constant 5.720600e-01 : f32
    %10 = vector.broadcast %cst_7 : f32 to vector<2x128xf32>
    %11 = arith.select %5, %10, %3 : vector<2x128xi1>, vector<2x128xf32>
    %c1_i32 = arith.constant 1 : i32
    %12 = vector.broadcast %c1_i32 : i32 to vector<2x128xi32>
    %13 = arith.cmpi eq, %1, %12 : vector<2x128xi32>
    %c0_8 = arith.constant 0 : index
    %c1 = arith.constant 1 : index
    %c0_9 = arith.constant 0 : index
    %c0_10 = arith.constant 0 : index
    %14 = vector.load %arg2[%c0_8, %c1, %c0_9, %c0_10] : memref<1x3x2x128xbf16, #tpu.memory_space<vmem>>, vector<1x1x2x128xbf16>
    %15 = vector.shape_cast %14 : vector<1x1x2x128xbf16> to vector<2x128xbf16>
    %16 = arith.extf %15 : vector<2x128xbf16> to vector<2x128xf32>
    %17 = arith.select %13, %16, %9 : vector<2x128xi1>, vector<2x128xf32>
    %cst_11 = arith.constant 0.156770647 : f32
    %18 = vector.broadcast %cst_11 : f32 to vector<2x128xf32>
    %19 = arith.select %13, %18, %11 : vector<2x128xi1>, vector<2x128xf32>
    %c2_i32 = arith.constant 2 : i32
    %20 = vector.broadcast %c2_i32 : i32 to vector<2x128xi32>
    %21 = arith.cmpi eq, %1, %20 : vector<2x128xi32>
    %c0_12 = arith.constant 0 : index
    %c2 = arith.constant 2 : index
    %c0_13 = arith.constant 0 : index
    %c0_14 = arith.constant 0 : index
    %22 = vector.load %arg2[%c0_12, %c2, %c0_13, %c0_14] : memref<1x3x2x128xbf16, #tpu.memory_space<vmem>>, vector<1x1x2x128xbf16>
    %23 = vector.shape_cast %22 : vector<1x1x2x128xbf16> to vector<2x128xbf16>
    %24 = arith.extf %23 : vector<2x128xbf16> to vector<2x128xf32>
    %25 = arith.select %21, %24, %17 : vector<2x128xi1>, vector<2x128xf32>
    %cst_15 = arith.constant 2.27116942 : f32
    %26 = vector.broadcast %cst_15 : f32 to vector<2x128xf32>
    %27 = arith.select %21, %26, %19 : vector<2x128xi1>, vector<2x128xf32>
    %cst_16 = arith.constant 1.000000e+00 : f32
    %28 = vector.broadcast %cst_16 : f32 to vector<2x128xf32>
    %29 = arith.subf %28, %25 : vector<2x128xf32>
    %30 = arith.mulf %29, %29 : vector<2x128xf32>
    %31 = math.log %25 : vector<2x128xf32>
    %cst_17 = arith.constant 0.000000e+00 : f32
    %32 = vector.broadcast %cst_17 : f32 to vector<2x128xf32>
    %33 = arith.subf %32, %31 : vector<2x128xf32>
    %34 = arith.mulf %27, %33 : vector<2x128xf32>
    %35 = arith.mulf %30, %34 : vector<2x128xf32>
    %cst_18 = arith.constant dense<0.000000e+00> : vector<128xf32>
    %36 = vector.multi_reduction <add>, %35, %cst_18 [0] : vector<2x128xf32> to vector<128xf32>
    %37 = vector.shape_cast %36 : vector<128xf32> to vector<1x128xf32>
    %c0_19 = arith.constant 0 : index
    %c0_20 = arith.constant 0 : index
    %c0_21 = arith.constant 0 : index
    %c0_22 = arith.constant 0 : index
    %38 = vector.load %arg4[%c0_19, %c0_20, %c0_21, %c0_22] : memref<1x1x1x128xf32, #tpu.memory_space<vmem>>, vector<1x1x1x128xf32>
    %39 = vector.shape_cast %38 : vector<1x1x1x128xf32> to vector<1x128xf32>
    %40 = vector.shape_cast %37 : vector<1x128xf32> to vector<1x1x1x128xf32>
    tpu.vector_store %arg4[%c0_19, %c0_20, %c0_21, %c0_22], %40 {strides = array<i32>} : memref<1x1x1x128xf32, #tpu.memory_space<vmem>>, vector<1x1x1x128xf32>,
    return
  }
  func.func @transform_0(%arg0: i32, %arg1: i32) -> (i32, i32, i32, i32) {
    %c0_i32 = arith.constant 0 : i32
    %c0_i32_0 = arith.constant 0 : i32
    %c0_i32_1 = arith.constant 0 : i32
    return %arg0, %c0_i32, %arg1, %c0_i32_0 : i32, i32, i32, i32
  }
  func.func @transform_1(%arg0: i32, %arg1: i32) -> (i32, i32, i32) {
    %c0_i32 = arith.constant 0 : i32
    %c0_i32_0 = arith.constant 0 : i32
    return %arg0, %arg1, %c0_i32 : i32, i32, i32
  }
  func.func @transform_2(%arg0: i32, %arg1: i32) -> (i32, i32, i32, i32) {
    %c0_i32 = arith.constant 0 : i32
    %c0_i32_0 = arith.constant 0 : i32
    %c0_i32_1 = arith.constant 0 : i32
    return %arg0, %arg1, %c0_i32, %c0_i32_0 : i32, i32, i32, i32
  }
}

</mosaic_0001>

<llo_original>
// kernel: tpu_custom_call.1
$region0: #{tpu_custom_call.1}
  #allocation0 [shape = 'u32[]', space=smem, size = 0x4, offset = 0x4, fixed_abs, tag = 'smem constant byte address 0x4 - core index']
  #allocation1 [shape = 'u32[144,128]{1,0:T(1,128)}', space=vmem, size = 0x12000, scoped, tag = 'internal scratch']
  %s0 = inlined_call_operand.hbm [shape: bf16[2,3,2,128], index: 0, kind: input, shape index: {}]
  %s1 = inlined_call_operand.hbm [shape: s32[2,2,128], index: 1, kind: input, shape index: {}]
  %s2 = inlined_call_operand.hbm [shape: f32[2,1,1,128], index: 2, kind: output, shape index: {}]
  %s3 = sld [smem:[#allocation0]]
  $region49: #{tpu_custom_call.1} parent=0
    _
  %s5 = ssub.s32 1, %s3
  %s6 = scalar_select 0, %s5, %s3
  $region1: #{tpu_custom_call.1} parent=0
    #allocation2 [shape = 'u8[3072]{0}', space=vmem, size = 0xc00, scoped, tag = 'input window, operand 0']
    #allocation3 [shape = 's32[2]{0}', space=sflag, size = 0x8, scoped, tag = 'scoped memory for tpu_custom_call.1']
    #allocation4 [shape = 's32[2]{0}', space=sflag, size = 0x8, scoped, tag = 'scoped memory for tpu_custom_call.1']
    #allocation5 [shape = 'u8[2048]{0}', space=vmem, size = 0x800, scoped, tag = 'input window, operand 1']
    #allocation6 [shape = 's32[2]{0}', space=sflag, size = 0x8, scoped, tag = 'scoped memory for tpu_custom_call.1']
    #allocation7 [shape = 'u8[1024]{0}', space=vmem, size = 0x400, scoped, tag = 'output window, operand 0']
    %7 = vsyncpa [#allocation3], 0
    %s8 = scalar_lea.sflag [#allocation3], 1
    %9 = vsyncpa %s8, 0
    %10 = vsyncpa [#allocation6], 0
    %s11 = scalar_lea.sflag [#allocation6], 1
    %12 = vsyncpa %s11, 0
    %13 = vsyncpa [#allocation4], 0
    %s14 = scalar_lea.sflag [#allocation4], 1
    %15 = vsyncpa %s14, 0
    loop: start=0, step=1, limit=4
    $region2: #{tpu_custom_call.1} parent=1 // loop_pre_header
      _
    $region3: #{tpu_custom_call.1} parent=1 // loop_header
      %s17 = sphi 0, %s21
      %p18 = scmp.ge.s32.totalorder %s17, 4
      %s24 = sphi 0, %s36
      %s25 = sphi 0, %s32
      %s26 = sphi 0, %s24
      %s27 = sphi 0, %s25
      %s28 = sphi 0, %s26
      %s29 = sphi 0, %s27
      %s41 = sphi 0, %s43
      %s44 = sphi 0, %s41
      %s45 = sphi 0, %s44
      %s61 = sphi 0, %s45
      %s69 = sphi 0, %s71
      %s72 = sphi 0, %s69
      %s73 = sphi 0, %s72
      %s89 = sphi 0, %s73
      %s97 = sphi 0, %s99
      %s100 = sphi 0, %s97
      %s101 = sphi 0, %s100
      %s117 = sphi 0, %s101
    $region4: #{tpu_custom_call.1} parent=1 // loop_header_branch
      %20 = sbr.rel (%p18) target = $region8
    $region5: #{tpu_custom_call.1} parent=1 // loop_body
      %s22 = ssub.s32 %s17, 1
      %s23 = ssub.s32 %s17, 2
      %s30 = sadd.s32 1, %s25
      %p31 = scmp.ge.s32.totalorder %s30, 1
      %s32 = scalar_select %p31, 0, %s30
      %s33 = sadd.s32 1, %s24
      %s34 = scalar_select %p31, %s33, %s24
      %p35 = scmp.ge.s32.totalorder %s34, 2
      %s36 = scalar_select %p35, 0, %s34
      %s37 = ssub.s32 %s24, %s36
      %s38 = ssub.s32 %s25, %s32
      %s39 = sor.u32 %s37, %s38
      %p40 = scmp.eq.s32.totalorder %s39, 0
      %s42 = sadd.s32 %s41, 1
      %s43 = scalar_select %p40, %s41, %s42
      %p46 = pneg %p40
      %p47 = scmp.eq.s32.totalorder %s17, 1
      %p48 = por %p46, %p47
      %p49 = scmp.ne.s32.totalorder %s41, %s44
      %p50 = scmp.eq.s32.totalorder %s17, 0
      %p51 = por %p49, %p50
      %p52 = scmp.ne.s32.totalorder %s41, %s44
      %p53 = scmp.eq.s32.totalorder %s22, 1
      %p54 = por %p52, %p53
      %p55 = scmp.ne.s32.totalorder %s44, %s45
      %p56 = scmp.eq.s32.totalorder %s22, 0
      %p57 = por %p55, %p56
      %p58 = scmp.ne.s32.totalorder %s44, %s45
      %p59 = scmp.eq.s32.totalorder %s23, 1
      %p60 = por %p58, %p59
      %p62 = scmp.ne.s32.totalorder %s45, %s61
      %p63 = scmp.eq.s32.totalorder %s23, 0
      %p64 = por %p62, %p63
      %s65 = ssub.s32 %s24, %s36
      %s66 = ssub.s32 %s25, %s32
      %s67 = sor.u32 %s65, %s66
      %p68 = scmp.eq.s32.totalorder %s67, 0
      %s70 = sadd.s32 %s69, 1
      %s71 = scalar_select %p68, %s69, %s70
      %p74 = pneg %p68
      %p75 = scmp.eq.s32.totalorder %s17, 1
      %p76 = por %p74, %p75
      %p77 = scmp.ne.s32.totalorder %s69, %s72
      %p78 = scmp.eq.s32.totalorder %s17, 0
      %p79 = por %p77, %p78
      %p80 = scmp.ne.s32.totalorder %s69, %s72
      %p81 = scmp.eq.s32.totalorder %s22, 1
      %p82 = por %p80, %p81
      %p83 = scmp.ne.s32.totalorder %s72, %s73
      %p84 = scmp.eq.s32.totalorder %s22, 0
      %p85 = por %p83, %p84
      %p86 = scmp.ne.s32.totalorder %s72, %s73
      %p87 = scmp.eq.s32.totalorder %s23, 1
      %p88 = por %p86, %p87
      %p90 = scmp.ne.s32.totalorder %s73, %s89
      %p91 = scmp.eq.s32.totalorder %s23, 0
      %p92 = por %p90, %p91
      %s93 = ssub.s32 %s24, %s36
      %s94 = ssub.s32 %s25, %s32
      %s95 = sor.u32 %s93, %s94
      %p96 = scmp.eq.s32.totalorder %s95, 0
      %s98 = sadd.s32 %s97, 1
      %s99 = scalar_select %p96, %s97, %s98
      %p102 = pneg %p96
      %p103 = scmp.eq.s32.totalorder %s17, 1
      %p104 = por %p102, %p103
      %p105 = scmp.ne.s32.totalorder %s97, %s100
      %p106 = scmp.eq.s32.totalorder %s17, 0
      %p107 = por %p105, %p106
      %p108 = scmp.ne.s32.totalorder %s97, %s100
      %p109 = scmp.eq.s32.totalorder %s22, 1
      %p110 = por %p108, %p109
      %p111 = scmp.ne.s32.totalorder %s100, %s101
      %p112 = scmp.eq.s32.totalorder %s22, 0
      %p113 = por %p111, %p112
      %p114 = scmp.ne.s32.totalorder %s100, %s101
      %p115 = scmp.eq.s32.totalorder %s23, 1
      %p116 = por %p114, %p115
      %p118 = scmp.ne.s32.totalorder %s101, %s117
      %p119 = scmp.eq.s32.totalorder %s23, 0
      %p120 = por %p118, %p119
      %p121 = scmp.le.s32.totalorder 1, %s17
      %p122 = scmp.lt.s32.totalorder %s17, 3
      %p123 = pnand %p121, %p122
      %p124 = pneg %p123
      // Predicated region
      $region9: #{tpu_custom_call.1} parent=5 // pred_check
        _
      $region10: #{tpu_custom_call.1} parent=5 // pred_check_branch
        %126 = sbr.rel (%p123) target = $region12
      $region11: #{tpu_custom_call.1} parent=5 // pred_region
        %s127 = ssub.s32 %s17, 1
      $region12: #{tpu_custom_call.1} parent=5 // pred_fallthru
        _
      %p128 = scmp.lt.s32.totalorder %s17, 2
      // Predicated region
      $region13: #{tpu_custom_call.1} parent=5 // pred_check
        %p129 = pneg %p128
      $region14: #{tpu_custom_call.1} parent=5 // pred_check_branch
        %131 = sbr.rel (%p129) target = $region16
      $region15: #{tpu_custom_call.1} parent=5 // pred_region
        // Predicated region
        $region17: #{tpu_custom_call.1} parent=15 // pred_check
          %p132 = pneg %p51
        $region18: #{tpu_custom_call.1} parent=15 // pred_check_branch
          %134 = sbr.rel (%p132) target = $region20
        $region19: #{tpu_custom_call.1} parent=15 // pred_region
          %s135 = sand.u32 %s41, 1
          %s136 = scalar_lea.sflag [#allocation3], %s135
          %s137 = sand.u32 %s41, 1
          %s138 = smul.addr %s137, 3
          %s139 = scalar_lea.vmem [#allocation2], %s138
          %s141 = ssub.s32 48, 48
          %142 = vsyncadd %s136, %s141
          %s143 = smul.addr %s24, 3
          %s144 = sadd.s32 %s25, %s143
          %s145 = smul.addr %s144, 16
          %s146 = scalar_lea.hbm %s0, %s145
          %s147 = sshll.u32 %s139, 4
          %s148 = int_to_ptr.vmem [resolvable:$true] %s147
          %153 = dma.hbm_to_vmem [thread:$0]  %s146, 48, %s148, %s136, 16, 16, 1
        $region20: #{tpu_custom_call.1} parent=15 // pred_fallthru
          _
        // Predicated region
        $region21: #{tpu_custom_call.1} parent=15 // pred_check
          %p154 = pneg %p79
        $region22: #{tpu_custom_call.1} parent=15 // pred_check_branch
          %156 = sbr.rel (%p154) target = $region24
        $region23: #{tpu_custom_call.1} parent=15 // pred_region
          %s157 = sand.u32 %s69, 1
          %s158 = scalar_lea.sflag [#allocation6], %s157
          %s159 = sand.u32 %s69, 1
          %s160 = smul.addr %s159, 2
          %s161 = scalar_lea.vmem [#allocation5], %s160
          %s163 = ssub.s32 32, 32
          %164 = vsyncadd %s158, %s163
          %s165 = sadd.s32 %s25, %s24
          %s166 = smul.addr %s165, 32
          %s167 = scalar_lea.hbm %s1, %s166
          %s169 = sshll.u32 %s161, 4
          %s170 = int_to_ptr.vmem [resolvable:$true] %s169
          %172 = dma.hbm_to_vmem [thread:$0]  %s167, 32, %s170, %s158
        $region24: #{tpu_custom_call.1} parent=15 // pred_fallthru
          _
      $region16: #{tpu_custom_call.1} parent=5 // pred_fallthru
        _
      %p173 = scmp.le.s32.totalorder 1, %s17
      %p174 = scmp.lt.s32.totalorder %s17, 3
      %p175 = pnand %p173, %p174
      %p176 = pneg %p175
      // Predicated region
      $region25: #{tpu_custom_call.1} parent=5 // pred_check
        _
      $region26: #{tpu_custom_call.1} parent=5 // pred_check_branch
        %178 = sbr.rel (%p175) target = $region28
      $region27: #{tpu_custom_call.1} parent=5 // pred_region
        %s179 = ssub.s32 %s17, 1
        %s180 = sand.u32 %s44, 1
        %s181 = scalar_lea.sflag [#allocation3], %s180
        %s182 = sand.u32 %s44, 1
        %s183 = smul.addr %s182, 3
        %s184 = scalar_lea.vmem [#allocation2], %s183
        // Predicated region
        $region29: #{tpu_custom_call.1} parent=27 // pred_check
          %p185 = pneg %p57
        $region30: #{tpu_custom_call.1} parent=27 // pred_check_branch
          %187 = sbr.rel (%p185) target = $region32
        $region31: #{tpu_custom_call.1} parent=27 // pred_region
          %188 = dma.done %s181, 48
        $region32: #{tpu_custom_call.1} parent=27 // pred_fallthru
          _
        %s189 = sand.u32 %s72, 1
        %s190 = scalar_lea.sflag [#allocation6], %s189
        %s191 = sand.u32 %s72, 1
        %s192 = smul.addr %s191, 2
        %s193 = scalar_lea.vmem [#allocation5], %s192
        // Predicated region
        $region33: #{tpu_custom_call.1} parent=27 // pred_check
          %p194 = pneg %p85
        $region34: #{tpu_custom_call.1} parent=27 // pred_check_branch
          %196 = sbr.rel (%p194) target = $region36
        $region35: #{tpu_custom_call.1} parent=27 // pred_region
          %197 = dma.done %s190, 32
        $region36: #{tpu_custom_call.1} parent=27 // pred_fallthru
          _
        %s198 = sand.u32 %s44, 1
        %s199 = scalar_lea.sflag [#allocation3], %s198
        %s200 = sand.u32 %s44, 1
        %s201 = smul.addr %s200, 3
        %s202 = scalar_lea.vmem [#allocation2], %s201
        %p203 = pneg %p57
        %p204 = pneg %p54
        %s205 = sand.u32 %s72, 1
        %s206 = scalar_lea.sflag [#allocation6], %s205
        %s207 = sand.u32 %s72, 1
        %s208 = smul.addr %s207, 2
        %s209 = scalar_lea.vmem [#allocation5], %s208
        %p210 = pneg %p85
        %p211 = pneg %p82
        %p212 = pneg %p113
        %p213 = pneg %p110
        %s214 = sand.u32 %s100, 1
        %s215 = scalar_lea.sflag [#allocation4], %s214
        %s216 = sand.u32 %s100, 1
        %s217 = scalar_lea.vmem [#allocation7], %s216
        %v218 = vld [vmem:[%s193] sm:$0x3]
        %vm219 = vcmp.eq.s32.totalorder %v218, 0
        %v220 = vld [vmem:[%s184] sm:$0x1]
        %v221 = vunpack.c.l.bf16 %v220
        %v222 = vsel %vm219, %v221, 1.0
        %v223 = vsel %vm219, 0.57206, 0.0
        %vm224 = vcmp.eq.s32.totalorder %v218, 1
        %s225 = scalar_lea.vmem %s184, 1 [#allocation2]
        %v226 = vld [vmem:[%s225] sm:$0x1]
        %v227 = vunpack.c.l.bf16 %v226
        %v228 = vsel %vm224, %v227, %v222
        %v229 = vsel %vm224, 0.15677065, %v223
        %vm230 = vcmp.eq.s32.totalorder %v218, 2
        %s231 = scalar_lea.vmem %s184, 2 [#allocation2]
        %v232 = vld [vmem:[%s231] sm:$0x1]
        %v233 = vunpack.c.l.bf16 %v232
        %v234 = vsel %vm230, %v233, %v228
        %v235 = vsel %vm230, 2.2711694, %v229
        %v236 = vsub.f32 1.0, %v234
        %v237 = vmul.f32 %v236, %v236
        %v238 = vlog2.pop %v234
        %v239 = vmul.f32 %v238, 0.6931472
        %v240 = vsub.f32 0.0, %v239
        %v241 = vmul.f32 %v235, %v240
        %v242 = vmul.f32 %v237, %v241
        %vm243 = vcmask 1041408
        %v244 = vsel %vm243, %v242, 0.0
        %v245 = vrot.slane %v244, 4
        %v246 = vadd.f32 %v244, %v245
        %v247 = vrot.slane %v246, 2
        %v248 = vadd.f32 %v246, %v247
        %v249 = vrot.slane %v248, 1
        %v250 = vadd.f32 %v248, %v249
        %251 = vst [vmem:[%s217] sm:$0x1] %v250
        %s252 = sand.u32 %s100, 1
        %s253 = scalar_lea.sflag [#allocation4], %s252
        %s254 = sand.u32 %s100, 1
        %s255 = scalar_lea.vmem [#allocation7], %s254
        // Predicated region
        $region37: #{tpu_custom_call.1} parent=27 // pred_check
          %p256 = pneg %p110
        $region38: #{tpu_custom_call.1} parent=27 // pred_check_branch
          %258 = sbr.rel (%p256) target = $region40
        $region39: #{tpu_custom_call.1} parent=27 // pred_region
          %s260 = ssub.s32 16, 16
          %261 = vsyncadd %s253, %s260
          %s262 = sadd.s32 %s27, %s26
          %s263 = smul.addr %s262, 16
          %s264 = scalar_lea.hbm %s2, %s263
          %s266 = sshll.u32 %s255, 4
          %s267 = int_to_ptr.vmem [resolvable:$true] %s266
          %269 = dma.vmem_to_hbm [thread:$0]  %s267, 16, %s264, %s253
        $region40: #{tpu_custom_call.1} parent=27 // pred_fallthru
          _
      $region28: #{tpu_custom_call.1} parent=5 // pred_fallthru
        _
      %p270 = scmp.le.s32.totalorder 2, %s17
      // Predicated region
      $region41: #{tpu_custom_call.1} parent=5 // pred_check
        %p271 = pneg %p270
      $region42: #{tpu_custom_call.1} parent=5 // pred_check_branch
        %273 = sbr.rel (%p271) target = $region44
      $region43: #{tpu_custom_call.1} parent=5 // pred_region
        %s274 = ssub.s32 %s17, 2
        // Predicated region
        $region45: #{tpu_custom_call.1} parent=43 // pred_check
          %p275 = pneg %p116
        $region46: #{tpu_custom_call.1} parent=43 // pred_check_branch
          %277 = sbr.rel (%p275) target = $region48
        $region47: #{tpu_custom_call.1} parent=43 // pred_region
          %s278 = sand.u32 %s101, 1
          %s279 = scalar_lea.sflag [#allocation4], %s278
          %s280 = sand.u32 %s101, 1
          %s281 = scalar_lea.vmem [#allocation7], %s280
          %282 = dma.done %s279, 16
        $region48: #{tpu_custom_call.1} parent=43 // pred_fallthru
          _
      $region44: #{tpu_custom_call.1} parent=5 // pred_fallthru
        _
    $region6: #{tpu_custom_call.1} parent=1 // loop_footer
      %s21 = sadd.s32 1, %s17
    $region7: #{tpu_custom_call.1} parent=1 // loop_footer_branch
      %16 = sbr.rel target = $region3
    $region8: #{tpu_custom_call.1} parent=1 // loop_exit
      _
    %283 = vsyncpa [#allocation3], 1
    %s284 = scalar_lea.sflag [#allocation3], 1
    %285 = vsyncpa %s284, 1
    %286 = vsyncpa [#allocation6], 1
    %s287 = scalar_lea.sflag [#allocation6], 1
    %288 = vsyncpa %s287, 1
    %289 = vsyncpa [#allocation4], 1
    %s290 = scalar_lea.sflag [#allocation4], 1
    %291 = vsyncpa %s290, 1

</llo_original>
